<compile_context>
chip_gen: v7x
topology: tpu7x:2x2x1
jax: 0.10.0
libtpu: 0.0.40
codegen_flags: <defaults>
</compile_context>

<pallas_src>
import functools

import jax
import jax.numpy as jnp
from jax.experimental import pallas as pl
from jax.experimental.pallas import tpu as pltpu


def _round_up(x, m):
    return (x + m - 1) // m * m


def _pick_tile(dim, cap, step):
    """Largest multiple of `step` <= min(dim, cap) that divides `dim`."""
    t = min(dim, cap)
    t -= t % step
    while dim % t:
        t -= step
    return t


# ---------------------------------------------------------------------------
# Fused matmul kernel: act((A @ W) + shift); A, W are bf16, accumulation f32.
# ---------------------------------------------------------------------------
def _matmul_bias_act_kernel(a_ref, w_ref, shift_ref, o_ref, acc_ref, *, act):
    @pl.when(pl.program_id(2) == 0)
    def _():
        acc_ref[...] = jnp.zeros_like(acc_ref)

    acc_ref[...] += jnp.dot(a_ref[...], w_ref[...],
                            preferred_element_type=jnp.float32)

    @pl.when(pl.program_id(2) == pl.num_programs(2) - 1)
    def _():
        y = acc_ref[...] + shift_ref[...]
        if act == "relu":
            y = jnp.maximum(y, 0.0)
        elif act == "leaky":
            y = jnp.where(y > 0, y, 0.1 * y)
        o_ref[...] = y.astype(o_ref.dtype)


@functools.lru_cache(maxsize=None)
def _build_matmul(Mp, Kp, Np, tm, tk, tn, act, out_dtype):
    call = pl.pallas_call(
        functools.partial(_matmul_bias_act_kernel, act=act),
        out_shape=jax.ShapeDtypeStruct((Mp, Np), out_dtype),
        grid_spec=pltpu.PrefetchScalarGridSpec(
            num_scalar_prefetch=0,
            grid=(Mp // tm, Np // tn, Kp // tk),
            in_specs=[
                pl.BlockSpec((tm, tk), lambda i, j, k: (i, k)),
                pl.BlockSpec((tk, tn), lambda i, j, k: (k, j)),
                pl.BlockSpec((1, tn), lambda i, j, k: (0, j)),
            ],
            out_specs=pl.BlockSpec((tm, tn), lambda i, j, k: (i, j)),
            scratch_shapes=[pltpu.VMEM((tm, tn), jnp.float32)],
        ),
        compiler_params=pltpu.CompilerParams(
            dimension_semantics=("parallel", "parallel", "arbitrary"),
            vmem_limit_bytes=64 * 1024 * 1024),
    )
    return jax.jit(call)


def matmul_bias_act(a, w_p, shift_p, n_out, act="none", out_dtype=jnp.bfloat16):
    """act((a @ w_p) + shift_p)[:, :n_out].

    a: (M, K) bf16; w_p: (Kp, Np) bf16, pre-padded + BN-scale folded;
    shift_p: (1, Np) f32.  Only the M/K tails of A are (cheaply) padded here.
    """
    a = a.astype(jnp.bfloat16)
    M, K = a.shape
    Kp, Np = w_p.shape
    Mp = _round_up(M, 8)
    if (Mp, Kp) != (M, K):
        a = jnp.pad(a, ((0, Mp - M), (0, Kp - K)))
    tm = _pick_tile(Mp, 256, 8)
    tn = _pick_tile(Np, 512, 128)
    tk = _pick_tile(Kp, 2048, 128)
    out = _build_matmul(Mp, Kp, Np, tm, tk, tn, act, out_dtype)(a, w_p, shift_p)
    return out[:M, :n_out]


# ---------------------------------------------------------------------------
# 2x2 max pool (stride 2): single kernel over a free (N*Ho, 2, Wo, 2*C) view.
# ---------------------------------------------------------------------------
def _maxpool_kernel(x_ref, o_ref):
    v = x_ref[...]                                    # (rb, 2, Wo, 2*C)
    m = jnp.maximum(v[:, 0, :, :], v[:, 1, :, :])     # max over H pair
    c = o_ref.shape[-1]
    o_ref[...] = jnp.maximum(m[:, :, :c], m[:, :, c:])  # max over W pair


@functools.lru_cache(maxsize=None)
def _build_maxpool(r, rb, wo, c, dtype):
    call = pl.pallas_call(
        _maxpool_kernel,
        out_shape=jax.ShapeDtypeStruct((r, wo, c), dtype),
        grid_spec=pltpu.PrefetchScalarGridSpec(
            num_scalar_prefetch=0,
            grid=(r // rb,),
            in_specs=[pl.BlockSpec((rb, 2, wo, 2 * c), lambda i: (i, 0, 0, 0))],
            out_specs=pl.BlockSpec((rb, wo, c), lambda i: (i, 0, 0)),
        ),
        compiler_params=pltpu.CompilerParams(
            dimension_semantics=("parallel",),
            vmem_limit_bytes=64 * 1024 * 1024),
    )
    return jax.jit(call)


def max_pool_2x2(x):
    """x: NHWC (even H, W) -> NHWC pooled by 2."""
    n, h, w, c = x.shape
    ho, wo = h // 2, w // 2
    r = n * ho
    xr = x.reshape(r, 2, wo, 2 * c)        # contiguous -> free reshape
    rb = _pick_tile(r, 256, 1)
    out = _build_maxpool(r, rb, wo, c, x.dtype)(xr)
    return out.reshape(n, ho, wo, c)


# ---------------------------------------------------------------------------
# ConvBlock = Conv2d + BatchNorm2d(eval) + ReLU via im2col + fused matmul
# ---------------------------------------------------------------------------
def conv_bn_relu(x, prep, stride, padding):
    kh, kw, cin, cout = prep["kh"], prep["kw"], prep["cin"], prep["cout"]
    n, h, w, c = x.shape
    assert c == cin
    ho = (h + 2 * padding - kh) // stride + 1
    wo = (w + 2 * padding - kw) // stride + 1
    if padding > 0:
        x = jnp.pad(x, ((0, 0), (padding, padding), (padding, padding), (0, 0)))
    if kh == 1 and kw == 1 and stride == 1 and padding == 0:
        a = x.reshape(n * ho * wo, cin)                 # 1x1 conv: no im2col
    else:
        patches = []
        for i in range(kh):
            for j in range(kw):
                patches.append(jax.lax.slice(
                    x, (0, i, j, 0),
                    (n, i + (ho - 1) * stride + 1, j + (wo - 1) * stride + 1, cin),
                    (1, stride, stride, 1)))
        a = jnp.stack(patches, axis=3).reshape(n * ho * wo, kh * kw * cin)
    y = matmul_bias_act(a, prep["w"], prep["shift"], cout,
                        act="relu", out_dtype=jnp.bfloat16)
    return y.reshape(n, ho, wo, cout)


# ---------------------------------------------------------------------------
# Parameter initialization (deterministic, synthetic) with one-time prep:
# BN folded into weights, cast to bf16, padded to 128-multiples.
# ---------------------------------------------------------------------------
CONV_CFGS = (
    [(3, 64, 7), (64, 192, 3),
     (192, 128, 1), (128, 256, 3), (256, 256, 1), (256, 512, 3)]
    + [(512, 256, 1), (256, 512, 3)] * 4
    + [(512, 512, 1), (512, 1024, 3)]
    + [(1024, 512, 1), (512, 1024, 3)] * 4
    + [(1024, 1024, 3), (1024, 1024, 3), (1024, 1024, 3), (1024, 1024, 3)]
)  # 28 conv blocks, matching Detect.forward order


def _prep_matmul_params(wm, shift):
    K, N = wm.shape
    Kp, Np = _round_up(K, 128), _round_up(N, 128)
    w_p = jnp.zeros((Kp, Np), jnp.bfloat16).at[:K, :N].set(wm.astype(jnp.bfloat16))
    s_p = jnp.zeros((1, Np), jnp.float32).at[0, :N].set(shift.astype(jnp.float32))
    return w_p, s_p


def _init_conv_block(key, cin, cout, k):
    kw_, kb, kg, kbe, km, kv = jax.random.split(key, 6)
    fan_in = cin * k * k
    w = jax.random.normal(kw_, (k, k, cin, cout), jnp.float32) * (2.0 / fan_in) ** 0.5
    b = 0.01 * jax.random.normal(kb, (cout,), jnp.float32)
    gamma = 1.0 + 0.05 * jax.random.normal(kg, (cout,), jnp.float32)
    beta = 0.05 * jax.random.normal(kbe, (cout,), jnp.float32)
    mean = 0.05 * jax.random.normal(km, (cout,), jnp.float32)
    var = 1.0 + 0.05 * jnp.abs(jax.random.normal(kv, (cout,), jnp.float32))
    eps = 1e-5
    scale = gamma / jnp.sqrt(var + eps)
    shift = beta + scale * (b - mean)
    wm = w.reshape(k * k * cin, cout) * scale[None, :]   # fold BN scale once
    w_p, s_p = _prep_matmul_params(wm, shift)
    return {"w": w_p, "shift": s_p, "kh": k, "kw": k, "cin": cin, "cout": cout}


def _init_linear(key, fin, fout):
    kw_, kb = jax.random.split(key)
    w = jax.random.normal(kw_, (fin, fout), jnp.float32) * (1.0 / fin) ** 0.5
    b = 0.01 * jax.random.normal(kb, (fout,), jnp.float32)
    w_p, b_p = _prep_matmul_params(w, b)
    return {"w": w_p, "shift": b_p, "fin": fin, "fout": fout}


def init_params(key, input_hw):
    assert input_hw % 64 == 0, "network downsamples spatially by 64x"
    s = input_hw // 64  # final conv spatial size (7 for the 448x448 spec input)
    keys = jax.random.split(key, len(CONV_CFGS) + 2)
    convs = [_init_conv_block(keys[i], cin, cout, k)
             for i, (cin, cout, k) in enumerate(CONV_CFGS)]
    # Spec hard-codes nn.Linear(1024*7*7, 4096); in_features scales with spatial.
    fc1 = _init_linear(keys[-2], 1024 * s * s, 4096)
    fc2 = _init_linear(keys[-1], 4096, 7 * 7 * 13)
    return {"convs": convs, "fc1": fc1, "fc2": fc2}


# ---------------------------------------------------------------------------
# Detect.forward
# ---------------------------------------------------------------------------
def detect_forward(x_nchw, params):
    x = jnp.transpose(x_nchw, (0, 2, 3, 1)).astype(jnp.bfloat16)  # NCHW -> NHWC
    convs = params["convs"]
    idx = [0]

    def conv(x, stride, pad):
        y = conv_bn_relu(x, convs[idx[0]], stride, pad)
        idx[0] += 1
        return y

    x = conv(x, 2, 3)            # conv_block1: 3->64, k7 s2 p3
    x = max_pool_2x2(x)
    x = conv(x, 1, 1)            # conv_block2: 64->192, k3
    x = max_pool_2x2(x)
    x = conv(x, 1, 0)            # conv_block3_1
    x = conv(x, 1, 1)            # conv_block3_2
    x = conv(x, 1, 0)            # conv_block3_3
    x = conv(x, 1, 1)            # conv_block3_4
    x = max_pool_2x2(x)
    for _ in range(4):           # conv_block4_1
        x = conv(x, 1, 0)
        x = conv(x, 1, 1)
    x = conv(x, 1, 0)            # conv_block4_2
    x = conv(x, 1, 1)            # conv_block4_3
    x = max_pool_2x2(x)
    for _ in range(4):           # conv_block5_1
        x = conv(x, 1, 0)
        x = conv(x, 1, 1)
    x = conv(x, 1, 1)            # conv_block5_2
    x = conv(x, 2, 1)            # conv_block5_3 (stride 2)
    x = conv(x, 1, 1)            # conv_block6_1
    x = conv(x, 1, 1)            # conv_block6_2
    assert idx[0] == len(convs)

    # FC head: Flatten (PyTorch NCHW order) -> Linear -> Dropout -> LeakyReLU(0.1) -> Linear
    n = x.shape[0]
    x_flat = jnp.transpose(x, (0, 3, 1, 2)).reshape(n, -1)
    fc1, fc2 = params["fc1"], params["fc2"]
    # TODO(synk): nn.Dropout(0.5) treated as eval-mode identity (no RNG masking).
    h = matmul_bias_act(x_flat, fc1["w"], fc1["shift"], fc1["fout"],
                        act="leaky", out_dtype=jnp.bfloat16)
    out = matmul_bias_act(h, fc2["w"], fc2["shift"], fc2["fout"],
                          act="none", out_dtype=jnp.float32)
    return out  # (N, 7*7*13)


if __name__ == "__main__":
    key = jax.random.PRNGKey(0)
    kx, kp = jax.random.split(key)
    # Small test size (full 28-conv-block architecture); 448x448 also works.
    batch, hw = 2, 64
    params = init_params(kp, input_hw=hw)
    x = jax.random.normal(kx, (batch, 3, hw, hw), jnp.float32)
    out = detect_forward(x, params)
    out = jax.block_until_ready(out)
    assert out.shape == (batch, 7 * 7 * 13), out.shape
    assert out.dtype == jnp.float32
    print("KERNEL_OK")
</pallas_src>

<mosaic_0001>
module attributes {stable_mosaic.version = 11 : i64} {
  func.func @_matmul_bias_act_kernel(%arg0: i32, %arg1: i32, %arg2: i32, %arg3: memref<256x256xbf16, #tpu.memory_space<vmem>>, %arg4: memref<256x128xbf16, #tpu.memory_space<vmem>>, %arg5: memref<1x128xf32, #tpu.memory_space<vmem>>, %arg6: memref<256x128xbf16, #tpu.memory_space<vmem>>, %arg7: memref<256x128xf32, #tpu.memory_space<vmem>>) attributes {dimension_semantics = [#tpu.dimension_semantics<parallel>, #tpu.dimension_semantics<parallel>, #tpu.dimension_semantics<arbitrary>], iteration_bounds = array<i64: 8, 1, 1>, scalar_prefetch = 0 : i64, scratch_operands = 1 : i64, tpu.core_type = #tpu.core_type<tc>, window_params = [{transform_indices = @transform_0, window_bounds = array<i64: 256, 256>}, {transform_indices = @transform_1, window_bounds = array<i64: 256, 128>}, {transform_indices = @transform_2, window_bounds = array<i64: 1, 128>}, {transform_indices = @transform_3, window_bounds = array<i64: 256, 128>}]} {
    %c0_i32 = arith.constant 0 : i32
    %0 = arith.cmpi eq, %arg2, %c0_i32 : i32
    %1 = arith.extui %0 : i1 to i32
    %c0_i32_0 = arith.constant 0 : i32
    %2 = arith.cmpi ne, %1, %c0_i32_0 : i32
    scf.if %2 {
      %cst_10 = arith.constant 0.000000e+00 : f32
      %12 = vector.broadcast %cst_10 : f32 to vector<256x128xf32>
      %c0_11 = arith.constant 0 : index
      %c0_12 = arith.constant 0 : index
      %13 = vector.load %arg7[%c0_11, %c0_12] : memref<256x128xf32, #tpu.memory_space<vmem>>, vector<256x128xf32>
      tpu.vector_store %arg7[%c0_11, %c0_12], %12 {strides = array<i32>} : memref<256x128xf32, #tpu.memory_space<vmem>>, vector<256x128xf32>,
    } else {
    }
    %c0 = arith.constant 0 : index
    %c0_1 = arith.constant 0 : index
    %3 = vector.load %arg7[%c0, %c0_1] : memref<256x128xf32, #tpu.memory_space<vmem>>, vector<256x128xf32>
    %c0_2 = arith.constant 0 : index
    %c0_3 = arith.constant 0 : index
    %4 = vector.load %arg3[%c0_2, %c0_3] : memref<256x256xbf16, #tpu.memory_space<vmem>>, vector<256x256xbf16>
    %c0_4 = arith.constant 0 : index
    %c0_5 = arith.constant 0 : index
    %5 = vector.load %arg4[%c0_4, %c0_5] : memref<256x128xbf16, #tpu.memory_space<vmem>>, vector<256x128xbf16>
    %cst = arith.constant dense<0.000000e+00> : vector<256x128xf32>
    %6 = tpu.matmul %4, %5, %cst {dimension_numbers = #tpu.dot_dimension_numbers<[1], [0], [0], [1], [0, 0, 1, 1], [], []>} : vector<256x256xbf16>, vector<256x128xbf16>, vector<256x128xf32> -> vector<256x128xf32>
    %7 = arith.addf %3, %6 : vector<256x128xf32>
    %c0_6 = arith.constant 0 : index
    %c0_7 = arith.constant 0 : index
    %8 = vector.load %arg7[%c0_6, %c0_7] : memref<256x128xf32, #tpu.memory_space<vmem>>, vector<256x128xf32>
    tpu.vector_store %arg7[%c0_6, %c0_7], %7 {strides = array<i32>} : memref<256x128xf32, #tpu.memory_space<vmem>>, vector<256x128xf32>,
    %c0_i32_8 = arith.constant 0 : i32
    %9 = arith.cmpi eq, %arg2, %c0_i32_8 : i32
    %10 = arith.extui %9 : i1 to i32
    %c0_i32_9 = arith.constant 0 : i32
    %11 = arith.cmpi ne, %10, %c0_i32_9 : i32
    scf.if %11 {
      %c0_10 = arith.constant 0 : index
      %c0_11 = arith.constant 0 : index
      %12 = vector.load %arg7[%c0_10, %c0_11] : memref<256x128xf32, #tpu.memory_space<vmem>>, vector<256x128xf32>
      %c0_12 = arith.constant 0 : index
      %c0_13 = arith.constant 0 : index
      %13 = vector.load %arg5[%c0_12, %c0_13] : memref<1x128xf32, #tpu.memory_space<vmem>>, vector<1x128xf32>
      %14 = vector.broadcast %13 : vector<1x128xf32> to vector<256x128xf32>
      %15 = arith.addf %12, %14 : vector<256x128xf32>
      %cst_14 = arith.constant 0.000000e+00 : f32
      %16 = vector.broadcast %cst_14 : f32 to vector<256x128xf32>
      %17 = arith.maximumf %15, %16 : vector<256x128xf32>
      %18 = arith.truncf %17 : vector<256x128xf32> to vector<256x128xbf16>
      %c0_15 = arith.constant 0 : index
      %c0_16 = arith.constant 0 : index
      %19 = vector.load %arg6[%c0_15, %c0_16] : memref<256x128xbf16, #tpu.memory_space<vmem>>, vector<256x128xbf16>
      tpu.vector_store %arg6[%c0_15, %c0_16], %18 {strides = array<i32>} : memref<256x128xbf16, #tpu.memory_space<vmem>>, vector<256x128xbf16>,
    } else {
    }
    return
  }
  func.func @transform_0(%arg0: i32, %arg1: i32, %arg2: i32) -> (i32, i32) {
    %c0_i32 = arith.constant 0 : i32
    return %arg0, %arg2 : i32, i32
  }
  func.func @transform_1(%arg0: i32, %arg1: i32, %arg2: i32) -> (i32, i32) {
    %c0_i32 = arith.constant 0 : i32
    return %arg2, %arg1 : i32, i32
  }
  func.func @transform_2(%arg0: i32, %arg1: i32, %arg2: i32) -> (i32, i32) {
    %c0_i32 = arith.constant 0 : i32
    %c0_i32_0 = arith.constant 0 : i32
    return %c0_i32, %arg1 : i32, i32
  }
  func.func @transform_3(%arg0: i32, %arg1: i32, %arg2: i32) -> (i32, i32) {
    %c0_i32 = arith.constant 0 : i32
    return %arg0, %arg1 : i32, i32
  }
}

</mosaic_0001>

<llo_original>
// kernel: tpu_custom_call.1
$region0: #{tpu_custom_call.1}
  #allocation0 [shape = 'u32[]', space=smem, size = 0x4, offset = 0x4, fixed_abs, tag = 'smem constant byte address 0x4 - core index']
  #allocation1 [shape = 'u32[144,128]{1,0:T(1,128)}', space=vmem, size = 0x12000, scoped, tag = 'internal scratch']
  #allocation2 [shape = 'f32[256,128]{1,0:T(8,128)}', space=vmem, size = 0x20000, scoped, tag = 'scratch operand']
  %s0 = inlined_call_operand.hbm [shape: bf16[2048,256], index: 0, kind: input, shape index: {}]
  %s1 = inlined_call_operand.hbm [shape: bf16[256,128], index: 1, kind: input, shape index: {}]
  %s2 = inlined_call_operand.hbm [shape: f32[1,128], index: 2, kind: input, shape index: {}]
  %s3 = inlined_call_operand.hbm [shape: bf16[2048,128], index: 3, kind: output, shape index: {}]
  %s4 = sld [smem:[#allocation0]]
  $region65: #{tpu_custom_call.1} parent=0
    _
  %s6 = ssub.s32 1, %s4
  %s7 = scalar_select 0, %s6, %s4
  $region1: #{tpu_custom_call.1} parent=0
    #allocation3 [shape = 'u8[262144]{0}', space=vmem, size = 0x40000, scoped, tag = 'input window, operand 0']
    #allocation4 [shape = 's32[2]{0}', space=sflag, size = 0x8, scoped, tag = 'scoped memory for tpu_custom_call.1']
    #allocation5 [shape = 's32[2]{0}', space=sflag, size = 0x8, scoped, tag = 'scoped memory for tpu_custom_call.1']
    #allocation6 [shape = 'u8[65536]{0}', space=vmem, size = 0x10000, scoped, tag = 'input window, operand 1, single buffered']
    #allocation7 [shape = 's32[1]{0}', space=sflag, size = 0x4, scoped, tag = 'scoped memory for tpu_custom_call.1']
    #allocation8 [shape = 'u8[512]{0}', space=vmem, size = 0x400, scoped, tag = 'input window, operand 2, single buffered']
    #allocation9 [shape = 'u8[131072]{0}', space=vmem, size = 0x20000, scoped, tag = 'output window, operand 0']
    %8 = vsyncpa [#allocation4], 0
    %s9 = scalar_lea.sflag [#allocation4], 1
    %10 = vsyncpa %s9, 0
    %11 = vsyncpa [#allocation7], 0
    %12 = vsyncpa [#allocation5], 0
    %s13 = scalar_lea.sflag [#allocation5], 1
    %14 = vsyncpa %s13, 0
    loop: start=0, step=1, limit=10
    $region2: #{tpu_custom_call.1} parent=1 // loop_pre_header
      _
    $region3: #{tpu_custom_call.1} parent=1 // loop_header
      %s16 = sphi 0, %s20
      %p17 = scmp.ge.s32.totalorder %s16, 10
      %s23 = sphi 0, %s42
      %s24 = sphi 0, %s38
      %s25 = sphi 0, %s34
      %s26 = sphi 0, %s23
      %s27 = sphi 0, %s24
      %s28 = sphi 0, %s25
      %s29 = sphi 0, %s26
      %s30 = sphi 0, %s27
      %s31 = sphi 0, %s28
      %s47 = sphi 0, %s49
      %s50 = sphi 0, %s47
      %s51 = sphi 0, %s50
      %s67 = sphi 0, %s51
      %s75 = sphi 0, %s77
      %s78 = sphi 0, %s75
      %s79 = sphi 0, %s78
      %s95 = sphi 0, %s79
      %s101 = sphi 0, %s103
      %s104 = sphi 0, %s101
      %s105 = sphi 0, %s104
      %s121 = sphi 0, %s105
      %s129 = sphi 0, %s131
      %s132 = sphi 0, %s129
      %s133 = sphi 0, %s132
      %s149 = sphi 0, %s133
    $region4: #{tpu_custom_call.1} parent=1 // loop_header_branch
      %19 = sbr.rel (%p17) target = $region8
    $region5: #{tpu_custom_call.1} parent=1 // loop_body
      %s21 = ssub.s32 %s16, 1
      %s22 = ssub.s32 %s16, 2
      %s32 = sadd.s32 1, %s25
      %p33 = scmp.ge.s32.totalorder %s32, 1
      %s34 = scalar_select %p33, 0, %s32
      %s35 = sadd.s32 1, %s24
      %s36 = scalar_select %p33, %s35, %s24
      %p37 = scmp.ge.s32.totalorder %s36, 1
      %s38 = scalar_select %p37, 0, %s36
      %s39 = sadd.s32 1, %s23
      %s40 = scalar_select %p37, %s39, %s23
      %p41 = scmp.ge.s32.totalorder %s40, 8
      %s42 = scalar_select %p41, 0, %s40
      %s43 = ssub.s32 %s23, %s42
      %s44 = ssub.s32 %s25, %s34
      %s45 = sor.u32 %s43, %s44
      %p46 = scmp.eq.s32.totalorder %s45, 0
      %s48 = sadd.s32 %s47, 1
      %s49 = scalar_select %p46, %s47, %s48
      %p52 = pneg %p46
      %p53 = scmp.eq.s32.totalorder %s16, 7
      %p54 = por %p52, %p53
      %p55 = scmp.ne.s32.totalorder %s47, %s50
      %p56 = scmp.eq.s32.totalorder %s16, 0
      %p57 = por %p55, %p56
      %p58 = scmp.ne.s32.totalorder %s47, %s50
      %p59 = scmp.eq.s32.totalorder %s21, 7
      %p60 = por %p58, %p59
      %p61 = scmp.ne.s32.totalorder %s50, %s51
      %p62 = scmp.eq.s32.totalorder %s21, 0
      %p63 = por %p61, %p62
      %p64 = scmp.ne.s32.totalorder %s50, %s51
      %p65 = scmp.eq.s32.totalorder %s22, 7
      %p66 = por %p64, %p65
      %p68 = scmp.ne.s32.totalorder %s51, %s67
      %p69 = scmp.eq.s32.totalorder %s22, 0
      %p70 = por %p68, %p69
      %s71 = ssub.s32 %s25, %s34
      %s72 = ssub.s32 %s24, %s38
      %s73 = sor.u32 %s71, %s72
      %p74 = scmp.eq.s32.totalorder %s73, 0
      %s76 = sadd.s32 %s75, 1
      %s77 = scalar_select %p74, %s75, %s76
      %p80 = pneg %p74
      %p81 = scmp.eq.s32.totalorder %s16, 7
      %p82 = por %p80, %p81
      %p83 = scmp.ne.s32.totalorder %s75, %s78
      %p84 = scmp.eq.s32.totalorder %s16, 0
      %p85 = por %p83, %p84
      %p86 = scmp.ne.s32.totalorder %s75, %s78
      %p87 = scmp.eq.s32.totalorder %s21, 7
      %p88 = por %p86, %p87
      %p89 = scmp.ne.s32.totalorder %s78, %s79
      %p90 = scmp.eq.s32.totalorder %s21, 0
      %p91 = por %p89, %p90
      %p92 = scmp.ne.s32.totalorder %s78, %s79
      %p93 = scmp.eq.s32.totalorder %s22, 7
      %p94 = por %p92, %p93
      %p96 = scmp.ne.s32.totalorder %s79, %s95
      %p97 = scmp.eq.s32.totalorder %s22, 0
      %p98 = por %p96, %p97
      %s99 = ssub.s32 %s24, %s38
      %p100 = scmp.eq.s32.totalorder %s99, 0
      %s102 = sadd.s32 %s101, 1
      %s103 = scalar_select %p100, %s101, %s102
      %p106 = pneg %p100
      %p107 = scmp.eq.s32.totalorder %s16, 7
      %p108 = por %p106, %p107
      %p109 = scmp.ne.s32.totalorder %s101, %s104
      %p110 = scmp.eq.s32.totalorder %s16, 0
      %p111 = por %p109, %p110
      %p112 = scmp.ne.s32.totalorder %s101, %s104
      %p113 = scmp.eq.s32.totalorder %s21, 7
      %p114 = por %p112, %p113
      %p115 = scmp.ne.s32.totalorder %s104, %s105
      %p116 = scmp.eq.s32.totalorder %s21, 0
      %p117 = por %p115, %p116
      %p118 = scmp.ne.s32.totalorder %s104, %s105
      %p119 = scmp.eq.s32.totalorder %s22, 7
      %p120 = por %p118, %p119
      %p122 = scmp.ne.s32.totalorder %s105, %s121
      %p123 = scmp.eq.s32.totalorder %s22, 0
      %p124 = por %p122, %p123
      %s125 = ssub.s32 %s23, %s42
      %s126 = ssub.s32 %s24, %s38
      %s127 = sor.u32 %s125, %s126
      %p128 = scmp.eq.s32.totalorder %s127, 0
      %s130 = sadd.s32 %s129, 1
      %s131 = scalar_select %p128, %s129, %s130
      %p134 = pneg %p128
      %p135 = scmp.eq.s32.totalorder %s16, 7
      %p136 = por %p134, %p135
      %p137 = scmp.ne.s32.totalorder %s129, %s132
      %p138 = scmp.eq.s32.totalorder %s16, 0
      %p139 = por %p137, %p138
      %p140 = scmp.ne.s32.totalorder %s129, %s132
      %p141 = scmp.eq.s32.totalorder %s21, 7
      %p142 = por %p140, %p141
      %p143 = scmp.ne.s32.totalorder %s132, %s133
      %p144 = scmp.eq.s32.totalorder %s21, 0
      %p145 = por %p143, %p144
      %p146 = scmp.ne.s32.totalorder %s132, %s133
      %p147 = scmp.eq.s32.totalorder %s22, 7
      %p148 = por %p146, %p147
      %p150 = scmp.ne.s32.totalorder %s133, %s149
      %p151 = scmp.eq.s32.totalorder %s22, 0
      %p152 = por %p150, %p151
      %p153 = scmp.le.s32.totalorder 1, %s16
      %p154 = scmp.lt.s32.totalorder %s16, 9
      %p155 = pnand %p153, %p154
      %p156 = pneg %p155
      // Predicated region
      $region9: #{tpu_custom_call.1} parent=5 // pred_check
        _
      $region10: #{tpu_custom_call.1} parent=5 // pred_check_branch
        %158 = sbr.rel (%p155) target = $region12
      $region11: #{tpu_custom_call.1} parent=5 // pred_region
        %s159 = ssub.s32 %s16, 1
        // Predicated region
        $region13: #{tpu_custom_call.1} parent=11 // pred_check
          %p160 = pneg %p91
        $region14: #{tpu_custom_call.1} parent=11 // pred_check_branch
          %162 = sbr.rel (%p160) target = $region16
        $region15: #{tpu_custom_call.1} parent=11 // pred_region
          %s163 = smul.u32 32, %s28
          %s165 = ssub.s32 2048, 2048
          %166 = vsyncadd [#allocation7], %s165
          %s167 = sadd.s32 %s27, %s163
          %s168 = smul.addr %s167, 64
          %s169 = scalar_lea.hbm %s1, %s168
          %s170 = sshll.u32 [#allocation6], 4
          %s171 = int_to_ptr.vmem [resolvable:$true] %s170
          %176 = dma.hbm_to_vmem [thread:$0]  %s169, 2048, %s171, [#allocation7], 64, 64, 4
        $region16: #{tpu_custom_call.1} parent=11 // pred_fallthru
          _
        // Predicated region
        $region17: #{tpu_custom_call.1} parent=11 // pred_check
          %p177 = pneg %p117
        $region18: #{tpu_custom_call.1} parent=11 // pred_check_branch
          %179 = sbr.rel (%p177) target = $region20
        $region19: #{tpu_custom_call.1} parent=11 // pred_region
          %s181 = ssub.s32 16, 16
          %182 = vsyncadd [#allocation7], %s181
          %s183 = smul.addr %s27, 16
          %s184 = scalar_lea.hbm %s2, %s183
          %s186 = sshll.u32 [#allocation8], 4
          %s187 = int_to_ptr.vmem [resolvable:$true] %s186
          %189 = dma.hbm_to_vmem [thread:$0]  %s184, 16, %s187, [#allocation7]
        $region20: #{tpu_custom_call.1} parent=11 // pred_fallthru
          _
      $region12: #{tpu_custom_call.1} parent=5 // pred_fallthru
        _
      %p190 = scmp.lt.s32.totalorder %s16, 8
      // Predicated region
      $region21: #{tpu_custom_call.1} parent=5 // pred_check
        %p191 = pneg %p190
      $region22: #{tpu_custom_call.1} parent=5 // pred_check_branch
        %193 = sbr.rel (%p191) target = $region24
      $region23: #{tpu_custom_call.1} parent=5 // pred_region
        // Predicated region
        $region25: #{tpu_custom_call.1} parent=23 // pred_check
          %p194 = pneg %p57
        $region26: #{tpu_custom_call.1} parent=23 // pred_check_branch
          %196 = sbr.rel (%p194) target = $region28
        $region27: #{tpu_custom_call.1} parent=23 // pred_region
          %s197 = sand.u32 %s47, 1
          %s198 = scalar_lea.sflag [#allocation4], %s197
          %s199 = sand.u32 %s47, 1
          %s200 = smul.addr %s199, 256
          %s201 = scalar_lea.vmem [#allocation3], %s200
          %s202 = smul.u32 32, %s23
          %s203 = smul.u32 2, %s25
          %s205 = ssub.s32 4096, 4096
          %206 = vsyncadd %s198, %s205
          %s207 = smul.addr %s202, 2
          %s208 = sadd.s32 %s203, %s207
          %s209 = smul.addr %s208, 64
          %s210 = scalar_lea.hbm %s0, %s209
          %s211 = sshll.u32 %s201, 4
          %s212 = int_to_ptr.vmem [resolvable:$true] %s211
          %217 = dma.hbm_to_vmem [thread:$0]  %s210, 4096, %s212, %s198, 128, 128, 8
        $region28: #{tpu_custom_call.1} parent=23 // pred_fallthru
          _
      $region24: #{tpu_custom_call.1} parent=5 // pred_fallthru
        _
      %p218 = scmp.le.s32.totalorder 1, %s16
      %p219 = scmp.lt.s32.totalorder %s16, 9
      %p220 = pnand %p218, %p219
      %p221 = pneg %p220
      // Predicated region
      $region29: #{tpu_custom_call.1} parent=5 // pred_check
        _
      $region30: #{tpu_custom_call.1} parent=5 // pred_check_branch
        %223 = sbr.rel (%p220) target = $region32
      $region31: #{tpu_custom_call.1} parent=5 // pred_region
        %s224 = ssub.s32 %s16, 1
        %s225 = sand.u32 %s50, 1
        %s226 = scalar_lea.sflag [#allocation4], %s225
        %s227 = sand.u32 %s50, 1
        %s228 = smul.addr %s227, 256
        %s229 = scalar_lea.vmem [#allocation3], %s228
        // Predicated region
        $region33: #{tpu_custom_call.1} parent=31 // pred_check
          %p230 = pneg %p63
        $region34: #{tpu_custom_call.1} parent=31 // pred_check_branch
          %232 = sbr.rel (%p230) target = $region36
        $region35: #{tpu_custom_call.1} parent=31 // pred_region
          %233 = dma.done %s226, 4096
        $region36: #{tpu_custom_call.1} parent=31 // pred_fallthru
          _
        // Predicated region
        $region37: #{tpu_custom_call.1} parent=31 // pred_check
          %p234 = pneg %p91
        $region38: #{tpu_custom_call.1} parent=31 // pred_check_branch
          %236 = sbr.rel (%p234) target = $region40
        $region39: #{tpu_custom_call.1} parent=31 // pred_region
          %237 = dma.done [#allocation7], 2048
        $region40: #{tpu_custom_call.1} parent=31 // pred_fallthru
          _
        // Predicated region
        $region41: #{tpu_custom_call.1} parent=31 // pred_check
          %p238 = pneg %p117
        $region42: #{tpu_custom_call.1} parent=31 // pred_check_branch
          %240 = sbr.rel (%p238) target = $region44
        $region43: #{tpu_custom_call.1} parent=31 // pred_region
          %241 = dma.done [#allocation7], 16
        $region44: #{tpu_custom_call.1} parent=31 // pred_fallthru
          _
        %s242 = sand.u32 %s50, 1
        %s243 = scalar_lea.sflag [#allocation4], %s242
        %s244 = sand.u32 %s50, 1
        %s245 = smul.addr %s244, 256
        %s246 = scalar_lea.vmem [#allocation3], %s245
        %p247 = pneg %p63
        %p248 = pneg %p60
        %p249 = pneg %p91
        %p250 = pneg %p88
        %p251 = pneg %p117
        %p252 = pneg %p114
        %p253 = pneg %p145
        %p254 = pneg %p142
        %s255 = sand.u32 %s132, 1
        %s256 = scalar_lea.sflag [#allocation5], %s255
        %s257 = sand.u32 %s132, 1
        %s258 = smul.addr %s257, 128
        %s259 = scalar_lea.vmem [#allocation9], %s258
        %s260 = smul.u32 32, %s26
        %s261 = smul.u32 2, %s28
        %s262 = smul.u32 32, %s28
        %s263 = smul.u32 32, %s26
        %p265 = scmp.eq.s32.totalorder %s28, 0
        // Predicated region
        $region45: #{tpu_custom_call.1} parent=31 // pred_check
          %p266 = pneg %p265
        $region46: #{tpu_custom_call.1} parent=31 // pred_check_branch
          %268 = sbr.rel (%p266) target = $region48
        $region47: #{tpu_custom_call.1} parent=31 // pred_region
          %269 = vst [vmem:[#allocation2] sm:$0xff] 0.0
          %270 = vst [vmem:[#allocation2 + $0x8] sm:$0xff] 0.0
          %271 = vst [vmem:[#allocation2 + $0x10] sm:$0xff] 0.0
          %272 = vst [vmem:[#allocation2 + $0x18] sm:$0xff] 0.0
          %273 = vst [vmem:[#allocation2 + $0x20] sm:$0xff] 0.0
          %274 = vst [vmem:[#allocation2 + $0x28] sm:$0xff] 0.0
          %275 = vst [vmem:[#allocation2 + $0x30] sm:$0xff] 0.0
          %276 = vst [vmem:[#allocation2 + $0x38] sm:$0xff] 0.0
          %277 = vst [vmem:[#allocation2 + $0x40] sm:$0xff] 0.0
          %278 = vst [vmem:[#allocation2 + $0x48] sm:$0xff] 0.0
          %279 = vst [vmem:[#allocation2 + $0x50] sm:$0xff] 0.0
          %280 = vst [vmem:[#allocation2 + $0x58] sm:$0xff] 0.0
          %281 = vst [vmem:[#allocation2 + $0x60] sm:$0xff] 0.0
          %282 = vst [vmem:[#allocation2 + $0x68] sm:$0xff] 0.0
          %283 = vst [vmem:[#allocation2 + $0x70] sm:$0xff] 0.0
          %284 = vst [vmem:[#allocation2 + $0x78] sm:$0xff] 0.0
          %285 = vst [vmem:[#allocation2 + $0x80] sm:$0xff] 0.0
          %286 = vst [vmem:[#allocation2 + $0x88] sm:$0xff] 0.0
          %287 = vst [vmem:[#allocation2 + $0x90] sm:$0xff] 0.0
          %288 = vst [vmem:[#allocation2 + $0x98] sm:$0xff] 0.0
          %289 = vst [vmem:[#allocation2 + $0xa0] sm:$0xff] 0.0
          %290 = vst [vmem:[#allocation2 + $0xa8] sm:$0xff] 0.0
          %291 = vst [vmem:[#allocation2 + $0xb0] sm:$0xff] 0.0
          %292 = vst [vmem:[#allocation2 + $0xb8] sm:$0xff] 0.0
          %293 = vst [vmem:[#allocation2 + $0xc0] sm:$0xff] 0.0
          %294 = vst [vmem:[#allocation2 + $0xc8] sm:$0xff] 0.0
          %295 = vst [vmem:[#allocation2 + $0xd0] sm:$0xff] 0.0
          %296 = vst [vmem:[#allocation2 + $0xd8] sm:$0xff] 0.0
          %297 = vst [vmem:[#allocation2 + $0xe0] sm:$0xff] 0.0
          %298 = vst [vmem:[#allocation2 + $0xe8] sm:$0xff] 0.0
          %299 = vst [vmem:[#allocation2 + $0xf0] sm:$0xff] 0.0
          %300 = vst [vmem:[#allocation2 + $0xf8] sm:$0xff] 0.0
        $region48: #{tpu_custom_call.1} parent=31 // pred_fallthru
          _
        %v301 = vld [vmem:[#allocation2] sm:$0xff]
        %v302 = vld [vmem:[#allocation2 + $0x8] sm:$0xff]
        %v303 = vld [vmem:[#allocation2 + $0x10] sm:$0xff]
        %v304 = vld [vmem:[#allocation2 + $0x18] sm:$0xff]
        %v305 = vld [vmem:[#allocation2 + $0x20] sm:$0xff]
        %v306 = vld [vmem:[#allocation2 + $0x28] sm:$0xff]
        %v307 = vld [vmem:[#allocation2 + $0x30] sm:$0xff]
        %v308 = vld [vmem:[#allocation2 + $0x38] sm:$0xff]
        %v309 = vld [vmem:[#allocation2 + $0x40] sm:$0xff]
        %v310 = vld [vmem:[#allocation2 + $0x48] sm:$0xff]
        %v311 = vld [vmem:[#allocation2 + $0x50] sm:$0xff]
        %v312 = vld [vmem:[#allocation2 + $0x58] sm:$0xff]
        %v313 = vld [vmem:[#allocation2 + $0x60] sm:$0xff]
        %v314 = vld [vmem:[#allocation2 + $0x68] sm:$0xff]
        %v315 = vld [vmem:[#allocation2 + $0x70] sm:$0xff]
        %v316 = vld [vmem:[#allocation2 + $0x78] sm:$0xff]
        %v317 = vld [vmem:[#allocation2 + $0x80] sm:$0xff]
        %v318 = vld [vmem:[#allocation2 + $0x88] sm:$0xff]
        %v319 = vld [vmem:[#allocation2 + $0x90] sm:$0xff]
        %v320 = vld [vmem:[#allocation2 + $0x98] sm:$0xff]
        %v321 = vld [vmem:[#allocation2 + $0xa0] sm:$0xff]
        %v322 = vld [vmem:[#allocation2 + $0xa8] sm:$0xff]
        %v323 = vld [vmem:[#allocation2 + $0xb0] sm:$0xff]
        %v324 = vld [vmem:[#allocation2 + $0xb8] sm:$0xff]
        %v325 = vld [vmem:[#allocation2 + $0xc0] sm:$0xff]
        %v326 = vld [vmem:[#allocation2 + $0xc8] sm:$0xff]
        %v327 = vld [vmem:[#allocation2 + $0xd0] sm:$0xff]
        %v328 = vld [vmem:[#allocation2 + $0xd8] sm:$0xff]
        %v329 = vld [vmem:[#allocation2 + $0xe0] sm:$0xff]
        %v330 = vld [vmem:[#allocation2 + $0xe8] sm:$0xff]
        %v331 = vld [vmem:[#allocation2 + $0xf0] sm:$0xff]
        %v332 = vld [vmem:[#allocation2 + $0xf8] sm:$0xff]
        %v333 = vld [vmem:[%s229] sm:$0xff]
        %v334 = vld [vmem:[%s229 + $0x8] sm:$0xff]
        %v335 = vld [vmem:[%s229 + $0x10] sm:$0xff]
        %v336 = vld [vmem:[%s229 + $0x18] sm:$0xff]
        %v337 = vld [vmem:[%s229 + $0x20] sm:$0xff]
        %v338 = vld [vmem:[%s229 + $0x28] sm:$0xff]
        %v339 = vld [vmem:[%s229 + $0x30] sm:$0xff]
        %v340 = vld [vmem:[%s229 + $0x38] sm:$0xff]
        %v341 = vld [vmem:[%s229 + $0x40] sm:$0xff]
        %v342 = vld [vmem:[%s229 + $0x48] sm:$0xff]
        %v343 = vld [vmem:[%s229 + $0x50] sm:$0xff]
        %v344 = vld [vmem:[%s229 + $0x58] sm:$0xff]
        %v345 = vld [vmem:[%s229 + $0x60] sm:$0xff]
        %v346 = vld [vmem:[%s229 + $0x68] sm:$0xff]
        %v347 = vld [vmem:[%s229 + $0x70] sm:$0xff]
        %v348 = vld [vmem:[%s229 + $0x78] sm:$0xff]
        %v349 = vld [vmem:[%s229 + $0x80] sm:$0xff]
        %v350 = vld [vmem:[%s229 + $0x88] sm:$0xff]
        %v351 = vld [vmem:[%s229 + $0x90] sm:$0xff]
        %v352 = vld [vmem:[%s229 + $0x98] sm:$0xff]
        %v353 = vld [vmem:[%s229 + $0xa0] sm:$0xff]
        %v354 = vld [vmem:[%s229 + $0xa8] sm:$0xff]
        %v355 = vld [vmem:[%s229 + $0xb0] sm:$0xff]
        %v356 = vld [vmem:[%s229 + $0xb8] sm:$0xff]
        %v357 = vld [vmem:[%s229 + $0xc0] sm:$0xff]
        %v358 = vld [vmem:[%s229 + $0xc8] sm:$0xff]
        %v359 = vld [vmem:[%s229 + $0xd0] sm:$0xff]
        %v360 = vld [vmem:[%s229 + $0xd8] sm:$0xff]
        %v361 = vld [vmem:[%s229 + $0xe0] sm:$0xff]
        %v362 = vld [vmem:[%s229 + $0xe8] sm:$0xff]
        %v363 = vld [vmem:[%s229 + $0xf0] sm:$0xff]
        %v364 = vld [vmem:[%s229 + $0xf8] sm:$0xff]
        %v365 = vld [vmem:[#allocation6] sm:$0xf]
        %v366 = vld [vmem:[#allocation6 + $0x4] sm:$0xf]
        %v367 = vld [vmem:[#allocation6 + $0x8] sm:$0xf]
        %v368 = vld [vmem:[#allocation6 + $0xc] sm:$0xf]
        %v369 = vld [vmem:[#allocation6 + $0x10] sm:$0xf]
        %v370 = vld [vmem:[#allocation6 + $0x14] sm:$0xf]
        %v371 = vld [vmem:[#allocation6 + $0x18] sm:$0xf]
        %v372 = vld [vmem:[#allocation6 + $0x1c] sm:$0xf]
        %v373 = vld [vmem:[#allocation6 + $0x20] sm:$0xf]
        %v374 = vld [vmem:[#allocation6 + $0x24] sm:$0xf]
        %v375 = vld [vmem:[#allocation6 + $0x28] sm:$0xf]
        %v376 = vld [vmem:[#allocation6 + $0x2c] sm:$0xf]
        %v377 = vld [vmem:[#allocation6 + $0x30] sm:$0xf]
        %v378 = vld [vmem:[#allocation6 + $0x34] sm:$0xf]
        %v379 = vld [vmem:[#allocation6 + $0x38] sm:$0xf]
        %v380 = vld [vmem:[#allocation6 + $0x3c] sm:$0xf]
        %v381 = vld [vmem:[#allocation6 + $0x40] sm:$0xf]
        %v382 = vld [vmem:[#allocation6 + $0x44] sm:$0xf]
        %v383 = vld [vmem:[#allocation6 + $0x48] sm:$0xf]
        %v384 = vld [vmem:[#allocation6 + $0x4c] sm:$0xf]
        %v385 = vld [vmem:[#allocation6 + $0x50] sm:$0xf]
        %v386 = vld [vmem:[#allocation6 + $0x54] sm:$0xf]
        %v387 = vld [vmem:[#allocation6 + $0x58] sm:$0xf]
        %v388 = vld [vmem:[#allocation6 + $0x5c] sm:$0xf]
        %v389 = vld [vmem:[#allocation6 + $0x60] sm:$0xf]
        %v390 = vld [vmem:[#allocation6 + $0x64] sm:$0xf]
        %v391 = vld [vmem:[#allocation6 + $0x68] sm:$0xf]
        %v392 = vld [vmem:[#allocation6 + $0x6c] sm:$0xf]
        %v393 = vld [vmem:[#allocation6 + $0x70] sm:$0xf]
        %v394 = vld [vmem:[#allocation6 + $0x74] sm:$0xf]
        %v395 = vld [vmem:[#allocation6 + $0x78] sm:$0xf]
        %v396 = vld [vmem:[#allocation6 + $0x7c] sm:$0xf]
        %v429 = vunpack.c.l.b16 %v333
        %v430 = vunpack.c.h.b16 %v333
        %v431 = vunpack.c.l.b16 %v334
        %v432 = vunpack.c.h.b16 %v334
        %v433 = vunpack.c.l.b16 %v335
        %v434 = vunpack.c.h.b16 %v335
        %v435 = vunpack.c.l.b16 %v336
        %v436 = vunpack.c.h.b16 %v336
        %v437 = vunpack.c.l.b16 %v337
        %v438 = vunpack.c.h.b16 %v337
        %v439 = vunpack.c.l.b16 %v338
        %v440 = vunpack.c.h.b16 %v338
        %v441 = vunpack.c.l.b16 %v339
        %v442 = vunpack.c.h.b16 %v339
        %v443 = vunpack.c.l.b16 %v340
        %v444 = vunpack.c.h.b16 %v340
        %v445 = vunpack.c.l.b16 %v341
        %v446 = vunpack.c.h.b16 %v341
        %v447 = vunpack.c.l.b16 %v342
        %v448 = vunpack.c.h.b16 %v342
        %v449 = vunpack.c.l.b16 %v343
        %v450 = vunpack.c.h.b16 %v343
        %v451 = vunpack.c.l.b16 %v344
        %v452 = vunpack.c.h.b16 %v344
        %v453 = vunpack.c.l.b16 %v345
        %v454 = vunpack.c.h.b16 %v345
        %v455 = vunpack.c.l.b16 %v346
        %v456 = vunpack.c.h.b16 %v346
        %v457 = vunpack.c.l.b16 %v347
        %v458 = vunpack.c.h.b16 %v347
        %v459 = vunpack.c.l.b16 %v348
        %v460 = vunpack.c.h.b16 %v348
        %v461 = vunpack.c.l.b16 %v349
        %v462 = vunpack.c.h.b16 %v349
        %v463 = vunpack.c.l.b16 %v350
        %v464 = vunpack.c.h.b16 %v350
        %v465 = vunpack.c.l.b16 %v351
        %v466 = vunpack.c.h.b16 %v351
        %v467 = vunpack.c.l.b16 %v352
        %v468 = vunpack.c.h.b16 %v352
        %v469 = vunpack.c.l.b16 %v353
        %v470 = vunpack.c.h.b16 %v353
        %v471 = vunpack.c.l.b16 %v354
        %v472 = vunpack.c.h.b16 %v354
        %v473 = vunpack.c.l.b16 %v355
        %v474 = vunpack.c.h.b16 %v355
        %v475 = vunpack.c.l.b16 %v356
        %v476 = vunpack.c.h.b16 %v356
        %v477 = vunpack.c.l.b16 %v357
        %v478 = vunpack.c.h.b16 %v357
        %v479 = vunpack.c.l.b16 %v358
        %v480 = vunpack.c.h.b16 %v358
        %v481 = vunpack.c.l.b16 %v359
        %v482 = vunpack.c.h.b16 %v359
        %v483 = vunpack.c.l.b16 %v360
        %v484 = vunpack.c.h.b16 %v360
        %v485 = vunpack.c.l.b16 %v361
        %v486 = vunpack.c.h.b16 %v361
        %v487 = vunpack.c.l.b16 %v362
        %v488 = vunpack.c.h.b16 %v362
        %v489 = vunpack.c.l.b16 %v363
        %v490 = vunpack.c.h.b16 %v363
        %v491 = vunpack.c.l.b16 %v364
        %v492 = vunpack.c.h.b16 %v364
        %v493 = vpack.c.b16 %v431, %v429
        %v494 = vpack.c.b16 %v432, %v430
        %v495 = vpack.c.b16 %v435, %v433
        %v496 = vpack.c.b16 %v436, %v434
        %v497 = vpack.c.b16 %v439, %v437
        %v498 = vpack.c.b16 %v440, %v438
        %v499 = vpack.c.b16 %v443, %v441
        %v500 = vpack.c.b16 %v444, %v442
        %v501 = vpack.c.b16 %v447, %v445
        %v502 = vpack.c.b16 %v448, %v446
        %v503 = vpack.c.b16 %v451, %v449
        %v504 = vpack.c.b16 %v452, %v450
        %v505 = vpack.c.b16 %v455, %v453
        %v506 = vpack.c.b16 %v456, %v454
        %v507 = vpack.c.b16 %v459, %v457
        %v508 = vpack.c.b16 %v460, %v458
        %v509 = vpack.c.b16 %v463, %v461
        %v510 = vpack.c.b16 %v464, %v462
        %v511 = vpack.c.b16 %v467, %v465
        %v512 = vpack.c.b16 %v468, %v466
        %v513 = vpack.c.b16 %v471, %v469
        %v514 = vpack.c.b16 %v472, %v470
        %v515 = vpack.c.b16 %v475, %v473
        %v516 = vpack.c.b16 %v476, %v474
        %v517 = vpack.c.b16 %v479, %v477
        %v518 = vpack.c.b16 %v480, %v478
        %v519 = vpack.c.b16 %v483, %v481
        %v520 = vpack.c.b16 %v484, %v482
        %v521 = vpack.c.b16 %v487, %v485
        %v522 = vpack.c.b16 %v488, %v486
        %v523 = vpack.c.b16 %v491, %v489
        %v524 = vpack.c.b16 %v492, %v490
        %v589 = vunpack.c.l.b16 %v365
        %v590 = vunpack.c.l.b16 %v366
        %v591 = vunpack.c.l.b16 %v367
        %v592 = vunpack.c.l.b16 %v368
        %v593 = vunpack.c.l.b16 %v369
        %v594 = vunpack.c.l.b16 %v370
        %v595 = vunpack.c.l.b16 %v371
        %v596 = vunpack.c.l.b16 %v372
        %v597 = vunpack.c.l.b16 %v373
        %v598 = vunpack.c.l.b16 %v374
        %v599 = vunpack.c.l.b16 %v375
        %v600 = vunpack.c.l.b16 %v376
        %v601 = vunpack.c.l.b16 %v377
        %v602 = vunpack.c.l.b16 %v378
        %v603 = vunpack.c.l.b16 %v379
        %v604 = vunpack.c.l.b16 %v380
        %v605 = vunpack.c.l.b16 %v381
        %v606 = vunpack.c.l.b16 %v382
        %v607 = vunpack.c.l.b16 %v383
        %v608 = vunpack.c.l.b16 %v384
        %v609 = vunpack.c.l.b16 %v385
        %v610 = vunpack.c.l.b16 %v386
        %v611 = vunpack.c.l.b16 %v387
        %v612 = vunpack.c.l.b16 %v388
        %v613 = vunpack.c.l.b16 %v389
        %v614 = vunpack.c.l.b16 %v390
        %v615 = vunpack.c.l.b16 %v391
        %v616 = vunpack.c.l.b16 %v392
        %v617 = vunpack.c.l.b16 %v393
        %v618 = vunpack.c.l.b16 %v394
        %v619 = vunpack.c.l.b16 %v395
        %v620 = vunpack.c.l.b16 %v396
        %v621 = vpack.c.b16 %v590, %v589
        %v622 = vpack.c.b16 %v592, %v591
        %v623 = vpack.c.b16 %v594, %v593
        %v624 = vpack.c.b16 %v596, %v595
        %v625 = vpack.c.b16 %v598, %v597
        %v626 = vpack.c.b16 %v600, %v599
        %v627 = vpack.c.b16 %v602, %v601
        %v628 = vpack.c.b16 %v604, %v603
        %v629 = vpack.c.b16 %v606, %v605
        %v630 = vpack.c.b16 %v608, %v607
        %v631 = vpack.c.b16 %v610, %v609
        %v632 = vpack.c.b16 %v612, %v611
        %v633 = vpack.c.b16 %v614, %v613
        %v634 = vpack.c.b16 %v616, %v615
        %v635 = vpack.c.b16 %v618, %v617
        %v636 = vpack.c.b16 %v620, %v619
        %653 = vmatprep.subr.bf16.mxu0 0
        %654 = vmatpush1.bf16.msra.mxu0 %v621
        %655 = vmatprep.subr.bf16.mxu0 0
        %656 = vmatpush1.bf16.msra.mxu0 %v622
        %657 = vmatprep.subr.bf16.mxu0 0
        %658 = vmatpush1.bf16.msra.mxu0 %v623
        %659 = vmatprep.subr.bf16.mxu0 0
        %660 = vmatpush1.bf16.msra.mxu0 %v624
        %661 = vmatprep.subr.bf16.mxu0 0
        %662 = vmatpush1.bf16.msra.mxu0 %v625
        %663 = vmatprep.subr.bf16.mxu0 0
        %664 = vmatpush1.bf16.msra.mxu0 %v626
        %665 = vmatprep.subr.bf16.mxu0 0
        %666 = vmatpush1.bf16.msra.mxu0 %v627
        %667 = vmatprep.subr.bf16.mxu0 0
        %668 = vmatpush1.bf16.msra.mxu0 %v628
        %669 = vmatprep.subr.bf16.mxu0 0
        %670 = vmatpush1.bf16.msra.mxu0 %v629
        %671 = vmatprep.subr.bf16.mxu0 0
        %672 = vmatpush1.bf16.msra.mxu0 %v630
        %673 = vmatprep.subr.bf16.mxu0 0
        %674 = vmatpush1.bf16.msra.mxu0 %v631
        %675 = vmatprep.subr.bf16.mxu0 0
        %676 = vmatpush1.bf16.msra.mxu0 %v632
        %677 = vmatprep.subr.bf16.mxu0 0
        %678 = vmatpush1.bf16.msra.mxu0 %v633
        %679 = vmatprep.subr.bf16.mxu0 0
        %680 = vmatpush1.bf16.msra.mxu0 %v634
        %681 = vmatprep.subr.bf16.mxu0 0
        %682 = vmatpush1.bf16.msra.mxu0 %v635
        %683 = vmatprep.subr.bf16.mxu0 0
        %684 = vmatpush1.bf16.msra.mxu0 %v636
        %685 = vmatprep.mubr.bf16.mxu0 %v494
        %686 = vmatmul.mubr.bf16.gmra.mrb[0].mxu0 %v493
        %v687 = vpop.f32.mrb[0].mxu0
        %v688 = vadd.f32 0.0, %v687
        %v689 = vpop.f32.mrb[0].mxu0
        %v690 = vpop.f32.mrb[0].mxu0
        %v691 = vadd.f32 0.0, %v690
        %v692 = vpop.f32.mrb[0].mxu0
        %693 = vmatprep.mubr.bf16.mxu0 %v496
        %694 = vmatmul.mubr.bf16.gmra.mrb[0].mxu0 %v495
        %v695 = vpop.f32.mrb[0].mxu0
        %v696 = vadd.f32 0.0, %v695
        %v697 = vpop.f32.mrb[0].mxu0
        %v698 = vpop.f32.mrb[0].mxu0
        %v699 = vadd.f32 0.0, %v698
        %v700 = vpop.f32.mrb[0].mxu0
        %701 = vmatprep.mubr.bf16.mxu0 %v498
        %702 = vmatmul.mubr.bf16.gmra.mrb[0].mxu0 %v497
        %v703 = vpop.f32.mrb[0].mxu0
        %v704 = vadd.f32 0.0, %v703
        %v705 = vpop.f32.mrb[0].mxu0
        %v706 = vpop.f32.mrb[0].mxu0
        %v707 = vadd.f32 0.0, %v706
        %v708 = vpop.f32.mrb[0].mxu0
        %709 = vmatprep.mubr.bf16.mxu0 %v500
        %710 = vmatmul.mubr.bf16.gmra.mrb[0].mxu0 %v499
        %v711 = vpop.f32.mrb[0].mxu0
        %v712 = vadd.f32 0.0, %v711
        %v713 = vpop.f32.mrb[0].mxu0
        %v714 = vpop.f32.mrb[0].mxu0
        %v715 = vadd.f32 0.0, %v714
        %v716 = vpop.f32.mrb[0].mxu0
        %717 = vmatprep.mubr.bf16.mxu0 %v502
        %718 = vmatmul.mubr.bf16.gmra.mrb[0].mxu0 %v501
        %v719 = vpop.f32.mrb[0].mxu0
        %v720 = vadd.f32 0.0, %v719
        %v721 = vpop.f32.mrb[0].mxu0
        %v722 = vpop.f32.mrb[0].mxu0
        %v723 = vadd.f32 0.0, %v722
        %v724 = vpop.f32.mrb[0].mxu0
        %725 = vmatprep.mubr.bf16.mxu0 %v504
        %726 = vmatmul.mubr.bf16.gmra.mrb[0].mxu0 %v503
        %v727 = vpop.f32.mrb[0].mxu0
        %v728 = vadd.f32 0.0, %v727
        %v729 = vpop.f32.mrb[0].mxu0
        %v730 = vpop.f32.mrb[0].mxu0
        %v731 = vadd.f32 0.0, %v730
        %v732 = vpop.f32.mrb[0].mxu0
        %733 = vmatprep.mubr.bf16.mxu0 %v506
        %734 = vmatmul.mubr.bf16.gmra.mrb[0].mxu0 %v505
        %v735 = vpop.f32.mrb[0].mxu0
        %v736 = vadd.f32 0.0, %v735
        %v737 = vpop.f32.mrb[0].mxu0
        %v738 = vpop.f32.mrb[0].mxu0
        %v739 = vadd.f32 0.0, %v738
        %v740 = vpop.f32.mrb[0].mxu0
        %741 = vmatprep.mubr.bf16.mxu0 %v508
        %742 = vmatmul.mubr.bf16.gmra.mrb[0].mxu0 %v507
        %v743 = vpop.f32.mrb[0].mxu0
        %v744 = vadd.f32 0.0, %v743
        %v745 = vpop.f32.mrb[0].mxu0
        %v746 = vpop.f32.mrb[0].mxu0
        %v747 = vadd.f32 0.0, %v746
        %v748 = vpop.f32.mrb[0].mxu0
        %749 = vmatprep.mubr.bf16.mxu0 %v510
        %750 = vmatmul.mubr.bf16.gmra.mrb[0].mxu0 %v509
        %v751 = vpop.f32.mrb[0].mxu0
        %v752 = vadd.f32 0.0, %v751
        %v753 = vpop.f32.mrb[0].mxu0
        %v754 = vpop.f32.mrb[0].mxu0
        %v755 = vadd.f32 0.0, %v754
        %v756 = vpop.f32.mrb[0].mxu0
        %757 = vmatprep.mubr.bf16.mxu0 %v512
        %758 = vmatmul.mubr.bf16.gmra.mrb[0].mxu0 %v511
        %v759 = vpop.f32.mrb[0].mxu0
        %v760 = vadd.f32 0.0, %v759
        %v761 = vpop.f32.mrb[0].mxu0
        %v762 = vpop.f32.mrb[0].mxu0
        %v763 = vadd.f32 0.0, %v762
        %v764 = vpop.f32.mrb[0].mxu0
        %765 = vmatprep.mubr.bf16.mxu0 %v514
        %766 = vmatmul.mubr.bf16.gmra.mrb[0].mxu0 %v513
        %v767 = vpop.f32.mrb[0].mxu0
        %v768 = vadd.f32 0.0, %v767
        %v769 = vpop.f32.mrb[0].mxu0
        %v770 = vpop.f32.mrb[0].mxu0
        %v771 = vadd.f32 0.0, %v770
        %v772 = vpop.f32.mrb[0].mxu0
        %773 = vmatprep.mubr.bf16.mxu0 %v516
        %774 = vmatmul.mubr.bf16.gmra.mrb[0].mxu0 %v515
        %v775 = vpop.f32.mrb[0].mxu0
        %v776 = vadd.f32 0.0, %v775
        %v777 = vpop.f32.mrb[0].mxu0
        %v778 = vpop.f32.mrb[0].mxu0
        %v779 = vadd.f32 0.0, %v778
        %v780 = vpop.f32.mrb[0].mxu0
        %781 = vmatprep.mubr.bf16.mxu0 %v518
        %782 = vmatmul.mubr.bf16.gmra.mrb[0].mxu0 %v517
        %v783 = vpop.f32.mrb[0].mxu0
        %v784 = vadd.f32 0.0, %v783
        %v785 = vpop.f32.mrb[0].mxu0
        %v786 = vpop.f32.mrb[0].mxu0
        %v787 = vadd.f32 0.0, %v786
        %v788 = vpop.f32.mrb[0].mxu0
        %789 = vmatprep.mubr.bf16.mxu0 %v520
        %790 = vmatmul.mubr.bf16.gmra.mrb[0].mxu0 %v519
        %v791 = vpop.f32.mrb[0].mxu0
        %v792 = vadd.f32 0.0, %v791
        %v793 = vpop.f32.mrb[0].mxu0
        %v794 = vpop.f32.mrb[0].mxu0
        %v795 = vadd.f32 0.0, %v794
        %v796 = vpop.f32.mrb[0].mxu0
        %797 = vmatprep.mubr.bf16.mxu0 %v522
        %798 = vmatmul.mubr.bf16.gmra.mrb[0].mxu0 %v521
        %v799 = vpop.f32.mrb[0].mxu0
        %v800 = vadd.f32 0.0, %v799
        %v801 = vpop.f32.mrb[0].mxu0
        %v802 = vpop.f32.mrb[0].mxu0
        %v803 = vadd.f32 0.0, %v802
        %v804 = vpop.f32.mrb[0].mxu0
        %805 = vmatprep.mubr.bf16.mxu0 %v524
        %806 = vmatmul.mubr.bf16.gmra.mrb[0].mxu0 %v523
        %v807 = vpop.f32.mrb[0].mxu0
        %v808 = vadd.f32 0.0, %v807
        %v809 = vpop.f32.mrb[0].mxu0
        %v810 = vpop.f32.mrb[0].mxu0
        %v811 = vadd.f32 0.0, %v810
        %v812 = vpop.f32.mrb[0].mxu0
        %813 = vdwg.mxu0
        %v814 = vadd.f32 %v301, %v688
        %v815 = vadd.f32 %v302, %v691
        %v816 = vadd.f32 %v303, %v696
        %v817 = vadd.f32 %v304, %v699
        %v818 = vadd.f32 %v305, %v704
        %v819 = vadd.f32 %v306, %v707
        %v820 = vadd.f32 %v307, %v712
        %v821 = vadd.f32 %v308, %v715
        %v822 = vadd.f32 %v309, %v720
        %v823 = vadd.f32 %v310, %v723
        %v824 = vadd.f32 %v311, %v728
        %v825 = vadd.f32 %v312, %v731
        %v826 = vadd.f32 %v313, %v736
        %v827 = vadd.f32 %v314, %v739
        %v828 = vadd.f32 %v315, %v744
        %v829 = vadd.f32 %v316, %v747
        %v830 = vadd.f32 %v317, %v752
        %v831 = vadd.f32 %v318, %v755
        %v832 = vadd.f32 %v319, %v760
        %v833 = vadd.f32 %v320, %v763
        %v834 = vadd.f32 %v321, %v768
        %v835 = vadd.f32 %v322, %v771
        %v836 = vadd.f32 %v323, %v776
        %v837 = vadd.f32 %v324, %v779
        %v838 = vadd.f32 %v325, %v784
        %v839 = vadd.f32 %v326, %v787
        %v840 = vadd.f32 %v327, %v792
        %v841 = vadd.f32 %v328, %v795
        %v842 = vadd.f32 %v329, %v800
        %v843 = vadd.f32 %v330, %v803
        %v844 = vadd.f32 %v331, %v808
        %v845 = vadd.f32 %v332, %v811
        %846 = vst [vmem:[#allocation2] sm:$0xff] %v814
        %847 = vst [vmem:[#allocation2 + $0x8] sm:$0xff] %v815
        %848 = vst [vmem:[#allocation2 + $0x10] sm:$0xff] %v816
        %849 = vst [vmem:[#allocation2 + $0x18] sm:$0xff] %v817
        %850 = vst [vmem:[#allocation2 + $0x20] sm:$0xff] %v818
        %851 = vst [vmem:[#allocation2 + $0x28] sm:$0xff] %v819
        %852 = vst [vmem:[#allocation2 + $0x30] sm:$0xff] %v820
        %853 = vst [vmem:[#allocation2 + $0x38] sm:$0xff] %v821
        %854 = vst [vmem:[#allocation2 + $0x40] sm:$0xff] %v822
        %855 = vst [vmem:[#allocation2 + $0x48] sm:$0xff] %v823
        %856 = vst [vmem:[#allocation2 + $0x50] sm:$0xff] %v824
        %857 = vst [vmem:[#allocation2 + $0x58] sm:$0xff] %v825
        %858 = vst [vmem:[#allocation2 + $0x60] sm:$0xff] %v826
        %859 = vst [vmem:[#allocation2 + $0x68] sm:$0xff] %v827
        %860 = vst [vmem:[#allocation2 + $0x70] sm:$0xff] %v828
        %861 = vst [vmem:[#allocation2 + $0x78] sm:$0xff] %v829
        %862 = vst [vmem:[#allocation2 + $0x80] sm:$0xff] %v830
        %863 = vst [vmem:[#allocation2 + $0x88] sm:$0xff] %v831
        %864 = vst [vmem:[#allocation2 + $0x90] sm:$0xff] %v832
        %865 = vst [vmem:[#allocation2 + $0x98] sm:$0xff] %v833
        %866 = vst [vmem:[#allocation2 + $0xa0] sm:$0xff] %v834
        %867 = vst [vmem:[#allocation2 + $0xa8] sm:$0xff] %v835
        %868 = vst [vmem:[#allocation2 + $0xb0] sm:$0xff] %v836
        %869 = vst [vmem:[#allocation2 + $0xb8] sm:$0xff] %v837
        %870 = vst [vmem:[#allocation2 + $0xc0] sm:$0xff] %v838
        %871 = vst [vmem:[#allocation2 + $0xc8] sm:$0xff] %v839
        %872 = vst [vmem:[#allocation2 + $0xd0] sm:$0xff] %v840
        %873 = vst [vmem:[#allocation2 + $0xd8] sm:$0xff] %v841
        %874 = vst [vmem:[#allocation2 + $0xe0] sm:$0xff] %v842
        %875 = vst [vmem:[#allocation2 + $0xe8] sm:$0xff] %v843
        %876 = vst [vmem:[#allocation2 + $0xf0] sm:$0xff] %v844
        %877 = vst [vmem:[#allocation2 + $0xf8] sm:$0xff] %v845
        // Predicated region
        $region49: #{tpu_custom_call.1} parent=31 // pred_check
          %p878 = pneg %p265
        $region50: #{tpu_custom_call.1} parent=31 // pred_check_branch
          %880 = sbr.rel (%p878) target = $region52
        $region51: #{tpu_custom_call.1} parent=31 // pred_region
          %v881 = vld [vmem:[#allocation2] sm:$0xff]
          %v882 = vld [vmem:[#allocation2 + $0x8] sm:$0xff]
          %v883 = vld [vmem:[#allocation2 + $0x10] sm:$0xff]
          %v884 = vld [vmem:[#allocation2 + $0x18] sm:$0xff]
          %v885 = vld [vmem:[#allocation2 + $0x20] sm:$0xff]
          %v886 = vld [vmem:[#allocation2 + $0x28] sm:$0xff]
          %v887 = vld [vmem:[#allocation2 + $0x30] sm:$0xff]
          %v888 = vld [vmem:[#allocation2 + $0x38] sm:$0xff]
          %v889 = vld [vmem:[#allocation2 + $0x40] sm:$0xff]
          %v890 = vld [vmem:[#allocation2 + $0x48] sm:$0xff]
          %v891 = vld [vmem:[#allocation2 + $0x50] sm:$0xff]
          %v892 = vld [vmem:[#allocation2 + $0x58] sm:$0xff]
          %v893 = vld [vmem:[#allocation2 + $0x60] sm:$0xff]
          %v894 = vld [vmem:[#allocation2 + $0x68] sm:$0xff]
          %v895 = vld [vmem:[#allocation2 + $0x70] sm:$0xff]
          %v896 = vld [vmem:[#allocation2 + $0x78] sm:$0xff]
          %v897 = vld [vmem:[#allocation2 + $0x80] sm:$0xff]
          %v898 = vld [vmem:[#allocation2 + $0x88] sm:$0xff]
          %v899 = vld [vmem:[#allocation2 + $0x90] sm:$0xff]
          %v900 = vld [vmem:[#allocation2 + $0x98] sm:$0xff]
          %v901 = vld [vmem:[#allocation2 + $0xa0] sm:$0xff]
          %v902 = vld [vmem:[#allocation2 + $0xa8] sm:$0xff]
          %v903 = vld [vmem:[#allocation2 + $0xb0] sm:$0xff]
          %v904 = vld [vmem:[#allocation2 + $0xb8] sm:$0xff]
          %v905 = vld [vmem:[#allocation2 + $0xc0] sm:$0xff]
          %v906 = vld [vmem:[#allocation2 + $0xc8] sm:$0xff]
          %v907 = vld [vmem:[#allocation2 + $0xd0] sm:$0xff]
          %v908 = vld [vmem:[#allocation2 + $0xd8] sm:$0xff]
          %v909 = vld [vmem:[#allocation2 + $0xe0] sm:$0xff]
          %v910 = vld [vmem:[#allocation2 + $0xe8] sm:$0xff]
          %v911 = vld [vmem:[#allocation2 + $0xf0] sm:$0xff]
          %v912 = vld [vmem:[#allocation2 + $0xf8] sm:$0xff]
          %v913 = vld [vmem:[#allocation8] sm:$0x1]
          %v915 = vlaneseq
          %v916 = vshrl.u32 %v915, 7
          %v917 = vsub.s32 0, %v916
          %v918 = vrot.slane %v913, %v917
          %v920 = vadd.f32 %v881, %v918
          %v921 = vadd.f32 %v882, %v918
          %v922 = vadd.f32 %v883, %v918
          %v923 = vadd.f32 %v884, %v918
          %v924 = vadd.f32 %v885, %v918
          %v925 = vadd.f32 %v886, %v918
          %v926 = vadd.f32 %v887, %v918
          %v927 = vadd.f32 %v888, %v918
          %v928 = vadd.f32 %v889, %v918
          %v929 = vadd.f32 %v890, %v918
          %v930 = vadd.f32 %v891, %v918
          %v931 = vadd.f32 %v892, %v918
          %v932 = vadd.f32 %v893, %v918
          %v933 = vadd.f32 %v894, %v918
          %v934 = vadd.f32 %v895, %v918
          %v935 = vadd.f32 %v896, %v918
          %v936 = vadd.f32 %v897, %v918
          %v937 = vadd.f32 %v898, %v918
          %v938 = vadd.f32 %v899, %v918
          %v939 = vadd.f32 %v900, %v918
          %v940 = vadd.f32 %v901, %v918
          %v941 = vadd.f32 %v902, %v918
          %v942 = vadd.f32 %v903, %v918
          %v943 = vadd.f32 %v904, %v918
          %v944 = vadd.f32 %v905, %v918
          %v945 = vadd.f32 %v906, %v918
          %v946 = vadd.f32 %v907, %v918
          %v947 = vadd.f32 %v908, %v918
          %v948 = vadd.f32 %v909, %v918
          %v949 = vadd.f32 %v910, %v918
          %v950 = vadd.f32 %v911, %v918
          %v951 = vadd.f32 %v912, %v918
          %v952 = vmax.f32 %v920, 0.0
          %v953 = vmax.f32 %v921, 0.0
          %v954 = vmax.f32 %v922, 0.0
          %v955 = vmax.f32 %v923, 0.0
          %v956 = vmax.f32 %v924, 0.0
          %v957 = vmax.f32 %v925, 0.0
          %v958 = vmax.f32 %v926, 0.0
          %v959 = vmax.f32 %v927, 0.0
          %v960 = vmax.f32 %v928, 0.0
          %v961 = vmax.f32 %v929, 0.0
          %v962 = vmax.f32 %v930, 0.0
          %v963 = vmax.f32 %v931, 0.0
          %v964 = vmax.f32 %v932, 0.0
          %v965 = vmax.f32 %v933, 0.0
          %v966 = vmax.f32 %v934, 0.0
          %v967 = vmax.f32 %v935, 0.0
          %v968 = vmax.f32 %v936, 0.0
          %v969 = vmax.f32 %v937, 0.0
          %v970 = vmax.f32 %v938, 0.0
          %v971 = vmax.f32 %v939, 0.0
          %v972 = vmax.f32 %v940, 0.0
          %v973 = vmax.f32 %v941, 0.0
          %v974 = vmax.f32 %v942, 0.0
          %v975 = vmax.f32 %v943, 0.0
          %v976 = vmax.f32 %v944, 0.0
          %v977 = vmax.f32 %v945, 0.0
          %v978 = vmax.f32 %v946, 0.0
          %v979 = vmax.f32 %v947, 0.0
          %v980 = vmax.f32 %v948, 0.0
          %v981 = vmax.f32 %v949, 0.0
          %v982 = vmax.f32 %v950, 0.0
          %v983 = vmax.f32 %v951, 0.0
          %v984 = vpack.c.bf16 %v953, %v952
          %v985 = vpack.c.bf16 %v955, %v954
          %v986 = vpack.c.bf16 %v957, %v956
          %v987 = vpack.c.bf16 %v959, %v958
          %v988 = vpack.c.bf16 %v961, %v960
          %v989 = vpack.c.bf16 %v963, %v962
          %v990 = vpack.c.bf16 %v965, %v964
          %v991 = vpack.c.bf16 %v967, %v966
          %v992 = vpack.c.bf16 %v969, %v968
          %v993 = vpack.c.bf16 %v971, %v970
          %v994 = vpack.c.bf16 %v973, %v972
          %v995 = vpack.c.bf16 %v975, %v974
          %v996 = vpack.c.bf16 %v977, %v976
          %v997 = vpack.c.bf16 %v979, %v978
          %v998 = vpack.c.bf16 %v981, %v980
          %v999 = vpack.c.bf16 %v983, %v982
          %v1016 = vunpack.c.l.b16 %v984
          %v1017 = vunpack.c.h.b16 %v984
          %v1018 = vunpack.c.l.b16 %v985
          %v1019 = vunpack.c.h.b16 %v985
          %v1020 = vunpack.c.l.b16 %v986
          %v1021 = vunpack.c.h.b16 %v986
          %v1022 = vunpack.c.l.b16 %v987
          %v1023 = vunpack.c.h.b16 %v987
          %v1024 = vunpack.c.l.b16 %v988
          %v1025 = vunpack.c.h.b16 %v988
          %v1026 = vunpack.c.l.b16 %v989
          %v1027 = vunpack.c.h.b16 %v989
          %v1028 = vunpack.c.l.b16 %v990
          %v1029 = vunpack.c.h.b16 %v990
          %v1030 = vunpack.c.l.b16 %v991
          %v1031 = vunpack.c.h.b16 %v991
          %v1032 = vunpack.c.l.b16 %v992
          %v1033 = vunpack.c.h.b16 %v992
          %v1034 = vunpack.c.l.b16 %v993
          %v1035 = vunpack.c.h.b16 %v993
          %v1036 = vunpack.c.l.b16 %v994
          %v1037 = vunpack.c.h.b16 %v994
          %v1038 = vunpack.c.l.b16 %v995
          %v1039 = vunpack.c.h.b16 %v995
          %v1040 = vunpack.c.l.b16 %v996
          %v1041 = vunpack.c.h.b16 %v996
          %v1042 = vunpack.c.l.b16 %v997
          %v1043 = vunpack.c.h.b16 %v997
          %v1044 = vunpack.c.l.b16 %v998
          %v1045 = vunpack.c.h.b16 %v998
          %v1046 = vunpack.c.l.b16 %v999
          %v1047 = vunpack.c.h.b16 %v999
          %v1048 = vpack.c.b16 %v1016, %v1016
          %v1049 = vpack.c.b16 %v1017, %v1017
          %v1050 = vpack.c.b16 %v1018, %v1018
          %v1051 = vpack.c.b16 %v1019, %v1019
          %v1052 = vpack.c.b16 %v1020, %v1020
          %v1053 = vpack.c.b16 %v1021, %v1021
          %v1054 = vpack.c.b16 %v1022, %v1022
          %v1055 = vpack.c.b16 %v1023, %v1023
          %v1056 = vpack.c.b16 %v1024, %v1024
          %v1057 = vpack.c.b16 %v1025, %v1025
          %v1058 = vpack.c.b16 %v1026, %v1026
          %v1059 = vpack.c.b16 %v1027, %v1027
          %v1060 = vpack.c.b16 %v1028, %v1028
          %v1061 = vpack.c.b16 %v1029, %v1029
          %v1062 = vpack.c.b16 %v1030, %v1030
          %v1063 = vpack.c.b16 %v1031, %v1031
          %v1064 = vpack.c.b16 %v1032, %v1032
          %v1065 = vpack.c.b16 %v1033, %v1033
          %v1066 = vpack.c.b16 %v1034, %v1034
          %v1067 = vpack.c.b16 %v1035, %v1035
          %v1068 = vpack.c.b16 %v1036, %v1036
          %v1069 = vpack.c.b16 %v1037, %v1037
          %v1070 = vpack.c.b16 %v1038, %v1038
          %v1071 = vpack.c.b16 %v1039, %v1039
          %v1072 = vpack.c.b16 %v1040, %v1040
          %v1073 = vpack.c.b16 %v1041, %v1041
          %v1074 = vpack.c.b16 %v1042, %v1042
          %v1075 = vpack.c.b16 %v1043, %v1043
          %v1076 = vpack.c.b16 %v1044, %v1044
          %v1077 = vpack.c.b16 %v1045, %v1045
          %v1078 = vpack.c.b16 %v1046, %v1046
          %v1079 = vpack.c.b16 %v1047, %v1047
          %1112 = vst [vmem:[%s259] sm:$0xf] %v1048
          %1113 = vst [vmem:[%s259 + $0x4] sm:$0xf] %v1049
          %1114 = vst [vmem:[%s259 + $0x8] sm:$0xf] %v1050
          %1115 = vst [vmem:[%s259 + $0xc] sm:$0xf] %v1051
          %1116 = vst [vmem:[%s259 + $0x10] sm:$0xf] %v1052
          %1117 = vst [vmem:[%s259 + $0x14] sm:$0xf] %v1053
          %1118 = vst [vmem:[%s259 + $0x18] sm:$0xf] %v1054
          %1119 = vst [vmem:[%s259 + $0x1c] sm:$0xf] %v1055
          %1120 = vst [vmem:[%s259 + $0x20] sm:$0xf] %v1056
          %1121 = vst [vmem:[%s259 + $0x24] sm:$0xf] %v1057
          %1122 = vst [vmem:[%s259 + $0x28] sm:$0xf] %v1058
          %1123 = vst [vmem:[%s259 + $0x2c] sm:$0xf] %v1059
          %1124 = vst [vmem:[%s259 + $0x30] sm:$0xf] %v1060
          %1125 = vst [vmem:[%s259 + $0x34] sm:$0xf] %v1061
          %1126 = vst [vmem:[%s259 + $0x38] sm:$0xf] %v1062
          %1127 = vst [vmem:[%s259 + $0x3c] sm:$0xf] %v1063
          %1128 = vst [vmem:[%s259 + $0x40] sm:$0xf] %v1064
          %1129 = vst [vmem:[%s259 + $0x44] sm:$0xf] %v1065
          %1130 = vst [vmem:[%s259 + $0x48] sm:$0xf] %v1066
          %1131 = vst [vmem:[%s259 + $0x4c] sm:$0xf] %v1067
          %1132 = vst [vmem:[%s259 + $0x50] sm:$0xf] %v1068
          %1133 = vst [vmem:[%s259 + $0x54] sm:$0xf] %v1069
          %1134 = vst [vmem:[%s259 + $0x58] sm:$0xf] %v1070
          %1135 = vst [vmem:[%s259 + $0x5c] sm:$0xf] %v1071
          %1136 = vst [vmem:[%s259 + $0x60] sm:$0xf] %v1072
          %1137 = vst [vmem:[%s259 + $0x64] sm:$0xf] %v1073
          %1138 = vst [vmem:[%s259 + $0x68] sm:$0xf] %v1074
          %1139 = vst [vmem:[%s259 + $0x6c] sm:$0xf] %v1075
          %1140 = vst [vmem:[%s259 + $0x70] sm:$0xf] %v1076
          %1141 = vst [vmem:[%s259 + $0x74] sm:$0xf] %v1077
          %1142 = vst [vmem:[%s259 + $0x78] sm:$0xf] %v1078
          %1143 = vst [vmem:[%s259 + $0x7c] sm:$0xf] %v1079
        $region52: #{tpu_custom_call.1} parent=31 // pred_fallthru
          _
        %s1144 = sand.u32 %s132, 1
        %s1145 = scalar_lea.sflag [#allocation5], %s1144
        %s1146 = sand.u32 %s132, 1
        %s1147 = smul.addr %s1146, 128
        %s1148 = scalar_lea.vmem [#allocation9], %s1147
        // Predicated region
        $region53: #{tpu_custom_call.1} parent=31 // pred_check
          %p1149 = pneg %p142
        $region54: #{tpu_custom_call.1} parent=31 // pred_check_branch
          %1151 = sbr.rel (%p1149) target = $region56
        $region55: #{tpu_custom_call.1} parent=31 // pred_region
          %s1152 = smul.u32 32, %s26
          %s1154 = ssub.s32 2048, 2048
          %1155 = vsyncadd %s1145, %s1154
          %s1156 = sadd.s32 %s27, %s1152
          %s1157 = smul.addr %s1156, 64
          %s1158 = scalar_lea.hbm %s3, %s1157
          %s1159 = sshll.u32 %s1148, 4
          %s1160 = int_to_ptr.vmem [resolvable:$true] %s1159
          %1165 = dma.vmem_to_hbm [thread:$0]  %s1160, 2048, %s1158, %s1145, 64, 64, 4
        $region56: #{tpu_custom_call.1} parent=31 // pred_fallthru
          _
      $region32: #{tpu_custom_call.1} parent=5 // pred_fallthru
        _
      %p1166 = scmp.le.s32.totalorder 2, %s16
      // Predicated region
      $region57: #{tpu_custom_call.1} parent=5 // pred_check
        %p1167 = pneg %p1166
      $region58: #{tpu_custom_call.1} parent=5 // pred_check_branch
        %1169 = sbr.rel (%p1167) target = $region60
      $region59: #{tpu_custom_call.1} parent=5 // pred_region
        %s1170 = ssub.s32 %s16, 2
        // Predicated region
        $region61: #{tpu_custom_call.1} parent=59 // pred_check
          %p1171 = pneg %p148
        $region62: #{tpu_custom_call.1} parent=59 // pred_check_branch
          %1173 = sbr.rel (%p1171) target = $region64
        $region63: #{tpu_custom_call.1} parent=59 // pred_region
          %s1174 = sand.u32 %s133, 1
          %s1175 = scalar_lea.sflag [#allocation5], %s1174
          %s1176 = sand.u32 %s133, 1
          %s1177 = smul.addr %s1176, 128
          %s1178 = scalar_lea.vmem [#allocation9], %s1177
          %1179 = dma.done %s1175, 2048
        $region64: #{tpu_custom_call.1} parent=59 // pred_fallthru
          _
      $region60: #{tpu_custom_call.1} parent=5 // pred_fallthru
        _
    $region6: #{tpu_custom_call.1} parent=1 // loop_footer
      %s20 = sadd.s32 1, %s16
    $region7: #{tpu_custom_call.1} parent=1 // loop_footer_branch
      %15 = sbr.rel target = $region3
    $region8: #{tpu_custom_call.1} parent=1 // loop_exit
      _
    %1180 = vsyncpa [#allocation4], 1
    %s1181 = scalar_lea.sflag [#allocation4], 1
    %1182 = vsyncpa %s1181, 1
    %1183 = vsyncpa [#allocation7], 1
    %1184 = vsyncpa [#allocation5], 1
    %s1185 = scalar_lea.sflag [#allocation5], 1
    %1186 = vsyncpa %s1185, 1

</llo_original>
